<compile_context>
chip_gen: v5e
topology: v5e:2x2
jax: 0.10.0
libtpu: 0.0.40
codegen_flags: <defaults>
</compile_context>

<pallas_src>
import jax
import jax.numpy as jnp
from jax.experimental import pallas as pl
from jax.experimental.pallas import tpu as pltpu


def _round_up(x, m):
    return ((x + m - 1) // m) * m


def mlp_kernel(x_ref,
               w1_ref, b1_ref,
               w2_ref, b2_ref,
               w3_ref, b3_ref,
               w4_ref, b4_ref,
               o_ref):
    # x_ref: (5, TILE_B) bf16, batch on the lane dimension.
    x = x_ref[...]

    # hidden1 -> dropout(identity) -> relu
    h = jnp.dot(w1_ref[...], x, preferred_element_type=jnp.float32) + b1_ref[...]
    h = jnp.maximum(h, 0.0).astype(jnp.bfloat16)

    # hidden2 -> dropout(identity)
    h = jnp.dot(w2_ref[...], h, preferred_element_type=jnp.float32) + b2_ref[...]
    h = h.astype(jnp.bfloat16)

    # hidden3 -> relu
    h = jnp.dot(w3_ref[...], h, preferred_element_type=jnp.float32) + b3_ref[...]
    h = jnp.maximum(h, 0.0).astype(jnp.bfloat16)

    # output layer
    out = jnp.dot(w4_ref[...], h, preferred_element_type=jnp.float32) + b4_ref[...]
    o_ref[...] = out.astype(o_ref.dtype)


def mlp_forward(x, params, *, tile_b=None):
    """x: (B, ...) -> flattened to (B, 5); returns (B, 4) float32."""
    B = x.shape[0]
    x2 = x.reshape(B, -1)                      # torch.flatten(x, 1) -> (B, 5)
    f_in = x2.shape[1]
    (w1, b1), (w2, b2), (w3, b3), (w4, b4) = params   # w: (out, in), b: (out,)
    n_out = w4.shape[0]

    # Batch tile: multiple of 128 lanes, capped so double-buffered x/out tiles
    # plus the (128, TILE_B) f32 intermediates stay far below the scoped VMEM
    # limit on every generation (incl. v7x's 64 MiB physical / 32 MiB scoped).
    if tile_b is None:
        tile_b = min(2048, _round_up(max(B, 1), 128))
    tile_b = _round_up(tile_b, 128)
    b_pad = _round_up(max(B, 1), tile_b)
    grid = (b_pad // tile_b,)

    # Feature-major, padded, bf16 input (single wrapper pass: pad+T+cast fuse).
    xt = x2.T                                  # (5, B)
    if b_pad != B:
        xt = jnp.pad(xt, ((0, 0), (0, b_pad - B)))
    xt = xt.astype(jnp.bfloat16)

    # Weights bf16 (MXU-native); biases f32 as (out, 1) columns so they
    # broadcast across the lane (batch) dimension inside the kernel.
    w1b, w2b, w3b, w4b = (w.astype(jnp.bfloat16) for w in (w1, w2, w3, w4))
    b1c, b2c, b3c, b4c = (b.reshape(-1, 1).astype(jnp.float32)
                          for b in (b1, b2, b3, b4))

    def resident(arr):
        # Whole (tiny) weight/bias stays in VMEM for every grid step.
        return pl.BlockSpec(arr.shape, lambda i: (0, 0))

    in_specs = [
        pl.BlockSpec((f_in, tile_b), lambda i: (0, i)),   # streaming x tile
        resident(w1b), resident(b1c),
        resident(w2b), resident(b2c),
        resident(w3b), resident(b3c),
        resident(w4b), resident(b4c),
    ]
    out_specs = pl.BlockSpec((n_out, tile_b), lambda i: (0, i))

    flops = 2 * b_pad * (5 * 128 + 128 * 64 + 64 * 32 + 32 * 4)
    bytes_accessed = (
        xt.size * 2                                    # bf16 input
        + n_out * b_pad * 4                            # f32 output
        + sum(w.size * 2 for w in (w1b, w2b, w3b, w4b))
        + sum(b.size * 4 for b in (b1c, b2c, b3c, b4c))
    )

    out_t = pl.pallas_call(
        mlp_kernel,
        out_shape=jax.ShapeDtypeStruct((n_out, b_pad), jnp.float32),
        grid=grid,
        in_specs=in_specs,
        out_specs=out_specs,
        compiler_params=pltpu.CompilerParams(
            dimension_semantics=("parallel",)),
        cost_estimate=pl.CostEstimate(
            flops=flops, transcendentals=0, bytes_accessed=bytes_accessed),
    )(xt, w1b, b1c, w2b, b2c, w3b, b3c, w4b, b4c)

    return out_t[:, :B].T                     # (B, 4) float32


def init_linear(key, fan_in, fan_out):
    """PyTorch-style (Kaiming-uniform) Linear init.

    Weight in native PyTorch layout (out, in); bias (out,).  Both float32.
    """
    kw, kb = jax.random.split(key)
    bound = 1.0 / jnp.sqrt(fan_in)
    w = jax.random.uniform(kw, (fan_out, fan_in), jnp.float32, -bound, bound)
    b = jax.random.uniform(kb, (fan_out,), jnp.float32, -bound, bound)
    return w, b


def make_params(key):
    k1, k2, k3, k4 = jax.random.split(key, 4)
    return (
        init_linear(k1, 5, 128),
        init_linear(k2, 128, 64),
        init_linear(k3, 64, 32),
        init_linear(k4, 32, 4),
    )


def mlp_reference(x, params):
    """Pure-JAX f32 reference (same math, dropout = identity in eval)."""
    B = x.shape[0]
    h = x.reshape(B, -1)
    (w1, b1), (w2, b2), (w3, b3), (w4, b4) = params
    h = jnp.maximum(h @ w1.T + b1, 0.0)
    h = h @ w2.T + b2
    h = jnp.maximum(h @ w3.T + b3, 0.0)
    return h @ w4.T + b4


if __name__ == "__main__":
    # TODO(synk): nn.Dropout is treated as identity (eval mode); training-mode
    # RNG masking is not implemented in the kernel.
    key = jax.random.PRNGKey(0)
    kx, kx2, kp = jax.random.split(key, 3)
    params = make_params(kp)

    # Small batch, single tile.
    B = 8
    x = jax.random.normal(kx, (B, 5), dtype=jnp.float32)
    out = jax.block_until_ready(mlp_forward(x, params))
    ref = mlp_reference(x, params)
    assert out.shape == (B, 4)
    # bf16 MXU operands with f32 accumulation -> loose-but-tight tolerance.
    assert jnp.allclose(out, ref, atol=5e-2, rtol=5e-2), (
        float(jnp.max(jnp.abs(out - ref))))

    # Non-multiple batch with explicit small tile: exercises padding and a
    # multi-step grid (3 tiles of 128).
    B2 = 260
    x2 = jax.random.normal(kx2, (B2, 5), dtype=jnp.float32)
    out2 = jax.block_until_ready(mlp_forward(x2, params, tile_b=128))
    ref2 = mlp_reference(x2, params)
    assert out2.shape == (B2, 4)
    assert jnp.allclose(out2, ref2, atol=5e-2, rtol=5e-2), (
        float(jnp.max(jnp.abs(out2 - ref2))))

    print("KERNEL_OK")
</pallas_src>

<mosaic_0001>
module attributes {stable_mosaic.version = 11 : i64} {
  func.func @mlp_kernel(%arg0: i32, %arg1: memref<5x128xbf16, #tpu.memory_space<vmem>>, %arg2: memref<128x5xbf16, #tpu.memory_space<vmem>>, %arg3: memref<128x1xf32, #tpu.memory_space<vmem>>, %arg4: memref<64x128xbf16, #tpu.memory_space<vmem>>, %arg5: memref<64x1xf32, #tpu.memory_space<vmem>>, %arg6: memref<32x64xbf16, #tpu.memory_space<vmem>>, %arg7: memref<32x1xf32, #tpu.memory_space<vmem>>, %arg8: memref<4x32xbf16, #tpu.memory_space<vmem>>, %arg9: memref<4x1xf32, #tpu.memory_space<vmem>>, %arg10: memref<4x128xf32, #tpu.memory_space<vmem>>) attributes {dimension_semantics = [#tpu.dimension_semantics<parallel>], iteration_bounds = array<i64: 1>, scalar_prefetch = 0 : i64, scratch_operands = 0 : i64, tpu.core_type = #tpu.core_type<tc>, window_params = [{transform_indices = @transform_0, window_bounds = array<i64: 5, 128>}, {pipeline_mode = #tpu.pipeline_mode<synchronous>, transform_indices = @transform_1, window_bounds = array<i64: 128, 5>}, {pipeline_mode = #tpu.pipeline_mode<synchronous>, transform_indices = @transform_2, window_bounds = array<i64: 128, 1>}, {pipeline_mode = #tpu.pipeline_mode<synchronous>, transform_indices = @transform_3, window_bounds = array<i64: 64, 128>}, {pipeline_mode = #tpu.pipeline_mode<synchronous>, transform_indices = @transform_4, window_bounds = array<i64: 64, 1>}, {pipeline_mode = #tpu.pipeline_mode<synchronous>, transform_indices = @transform_5, window_bounds = array<i64: 32, 64>}, {pipeline_mode = #tpu.pipeline_mode<synchronous>, transform_indices = @transform_6, window_bounds = array<i64: 32, 1>}, {pipeline_mode = #tpu.pipeline_mode<synchronous>, transform_indices = @transform_7, window_bounds = array<i64: 4, 32>}, {pipeline_mode = #tpu.pipeline_mode<synchronous>, transform_indices = @transform_8, window_bounds = array<i64: 4, 1>}, {transform_indices = @transform_9, window_bounds = array<i64: 4, 128>}]} {
    %c0 = arith.constant 0 : index
    %c0_0 = arith.constant 0 : index
    %0 = vector.load %arg1[%c0, %c0_0] : memref<5x128xbf16, #tpu.memory_space<vmem>>, vector<5x128xbf16>
    %c0_1 = arith.constant 0 : index
    %c0_2 = arith.constant 0 : index
    %1 = vector.load %arg2[%c0_1, %c0_2] : memref<128x5xbf16, #tpu.memory_space<vmem>>, vector<128x5xbf16>
    %cst = arith.constant dense<0.000000e+00> : vector<128x128xf32>
    %2 = tpu.matmul %1, %0, %cst {dimension_numbers = #tpu.dot_dimension_numbers<[1], [0], [0], [1], [0, 0, 1, 1], [], []>} : vector<128x5xbf16>, vector<5x128xbf16>, vector<128x128xf32> -> vector<128x128xf32>
    %c0_3 = arith.constant 0 : index
    %c0_4 = arith.constant 0 : index
    %3 = vector.load %arg3[%c0_3, %c0_4] : memref<128x1xf32, #tpu.memory_space<vmem>>, vector<128x1xf32>
    %4 = vector.broadcast %3 : vector<128x1xf32> to vector<128x128xf32>
    %5 = arith.addf %2, %4 : vector<128x128xf32>
    %cst_5 = arith.constant 0.000000e+00 : f32
    %6 = vector.broadcast %cst_5 : f32 to vector<128x128xf32>
    %7 = arith.maximumf %5, %6 : vector<128x128xf32>
    %8 = arith.truncf %7 : vector<128x128xf32> to vector<128x128xbf16>
    %c0_6 = arith.constant 0 : index
    %c0_7 = arith.constant 0 : index
    %9 = vector.load %arg4[%c0_6, %c0_7] : memref<64x128xbf16, #tpu.memory_space<vmem>>, vector<64x128xbf16>
    %cst_8 = arith.constant dense<0.000000e+00> : vector<64x128xf32>
    %10 = tpu.matmul %9, %8, %cst_8 {dimension_numbers = #tpu.dot_dimension_numbers<[1], [0], [0], [1], [0, 0, 1, 1], [], []>} : vector<64x128xbf16>, vector<128x128xbf16>, vector<64x128xf32> -> vector<64x128xf32>
    %c0_9 = arith.constant 0 : index
    %c0_10 = arith.constant 0 : index
    %11 = vector.load %arg5[%c0_9, %c0_10] : memref<64x1xf32, #tpu.memory_space<vmem>>, vector<64x1xf32>
    %12 = vector.broadcast %11 : vector<64x1xf32> to vector<64x128xf32>
    %13 = arith.addf %10, %12 : vector<64x128xf32>
    %14 = arith.truncf %13 : vector<64x128xf32> to vector<64x128xbf16>
    %c0_11 = arith.constant 0 : index
    %c0_12 = arith.constant 0 : index
    %15 = vector.load %arg6[%c0_11, %c0_12] : memref<32x64xbf16, #tpu.memory_space<vmem>>, vector<32x64xbf16>
    %cst_13 = arith.constant dense<0.000000e+00> : vector<32x128xf32>
    %16 = tpu.matmul %15, %14, %cst_13 {dimension_numbers = #tpu.dot_dimension_numbers<[1], [0], [0], [1], [0, 0, 1, 1], [], []>} : vector<32x64xbf16>, vector<64x128xbf16>, vector<32x128xf32> -> vector<32x128xf32>
    %c0_14 = arith.constant 0 : index
    %c0_15 = arith.constant 0 : index
    %17 = vector.load %arg7[%c0_14, %c0_15] : memref<32x1xf32, #tpu.memory_space<vmem>>, vector<32x1xf32>
    %18 = vector.broadcast %17 : vector<32x1xf32> to vector<32x128xf32>
    %19 = arith.addf %16, %18 : vector<32x128xf32>
    %cst_16 = arith.constant 0.000000e+00 : f32
    %20 = vector.broadcast %cst_16 : f32 to vector<32x128xf32>
    %21 = arith.maximumf %19, %20 : vector<32x128xf32>
    %22 = arith.truncf %21 : vector<32x128xf32> to vector<32x128xbf16>
    %c0_17 = arith.constant 0 : index
    %c0_18 = arith.constant 0 : index
    %23 = vector.load %arg8[%c0_17, %c0_18] : memref<4x32xbf16, #tpu.memory_space<vmem>>, vector<4x32xbf16>
    %cst_19 = arith.constant dense<0.000000e+00> : vector<4x128xf32>
    %24 = tpu.matmul %23, %22, %cst_19 {dimension_numbers = #tpu.dot_dimension_numbers<[1], [0], [0], [1], [0, 0, 1, 1], [], []>} : vector<4x32xbf16>, vector<32x128xbf16>, vector<4x128xf32> -> vector<4x128xf32>
    %c0_20 = arith.constant 0 : index
    %c0_21 = arith.constant 0 : index
    %25 = vector.load %arg9[%c0_20, %c0_21] : memref<4x1xf32, #tpu.memory_space<vmem>>, vector<4x1xf32>
    %26 = vector.broadcast %25 : vector<4x1xf32> to vector<4x128xf32>
    %27 = arith.addf %24, %26 : vector<4x128xf32>
    %c0_22 = arith.constant 0 : index
    %c0_23 = arith.constant 0 : index
    %28 = vector.load %arg10[%c0_22, %c0_23] : memref<4x128xf32, #tpu.memory_space<vmem>>, vector<4x128xf32>
    tpu.vector_store %arg10[%c0_22, %c0_23], %27 {strides = array<i32>} : memref<4x128xf32, #tpu.memory_space<vmem>>, vector<4x128xf32>,
    return
  }
  func.func @transform_0(%arg0: i32) -> (i32, i32) {
    %c0_i32 = arith.constant 0 : i32
    %c0_i32_0 = arith.constant 0 : i32
    return %c0_i32, %arg0 : i32, i32
  }
  func.func @transform_1(%arg0: i32) -> (i32, i32) {
    %c0_i32 = arith.constant 0 : i32
    %c0_i32_0 = arith.constant 0 : i32
    %c0_i32_1 = arith.constant 0 : i32
    return %c0_i32, %c0_i32_0 : i32, i32
  }
  func.func @transform_2(%arg0: i32) -> (i32, i32) {
    %c0_i32 = arith.constant 0 : i32
    %c0_i32_0 = arith.constant 0 : i32
    %c0_i32_1 = arith.constant 0 : i32
    return %c0_i32, %c0_i32_0 : i32, i32
  }
  func.func @transform_3(%arg0: i32) -> (i32, i32) {
    %c0_i32 = arith.constant 0 : i32
    %c0_i32_0 = arith.constant 0 : i32
    %c0_i32_1 = arith.constant 0 : i32
    return %c0_i32, %c0_i32_0 : i32, i32
  }
  func.func @transform_4(%arg0: i32) -> (i32, i32) {
    %c0_i32 = arith.constant 0 : i32
    %c0_i32_0 = arith.constant 0 : i32
    %c0_i32_1 = arith.constant 0 : i32
    return %c0_i32, %c0_i32_0 : i32, i32
  }
  func.func @transform_5(%arg0: i32) -> (i32, i32) {
    %c0_i32 = arith.constant 0 : i32
    %c0_i32_0 = arith.constant 0 : i32
    %c0_i32_1 = arith.constant 0 : i32
    return %c0_i32, %c0_i32_0 : i32, i32
  }
  func.func @transform_6(%arg0: i32) -> (i32, i32) {
    %c0_i32 = arith.constant 0 : i32
    %c0_i32_0 = arith.constant 0 : i32
    %c0_i32_1 = arith.constant 0 : i32
    return %c0_i32, %c0_i32_0 : i32, i32
  }
  func.func @transform_7(%arg0: i32) -> (i32, i32) {
    %c0_i32 = arith.constant 0 : i32
    %c0_i32_0 = arith.constant 0 : i32
    %c0_i32_1 = arith.constant 0 : i32
    return %c0_i32, %c0_i32_0 : i32, i32
  }
  func.func @transform_8(%arg0: i32) -> (i32, i32) {
    %c0_i32 = arith.constant 0 : i32
    %c0_i32_0 = arith.constant 0 : i32
    %c0_i32_1 = arith.constant 0 : i32
    return %c0_i32, %c0_i32_0 : i32, i32
  }
  func.func @transform_9(%arg0: i32) -> (i32, i32) {
    %c0_i32 = arith.constant 0 : i32
    %c0_i32_0 = arith.constant 0 : i32
    return %c0_i32, %arg0 : i32, i32
  }
}

</mosaic_0001>

<llo_original>
// kernel: tpu_custom_call.1
$region0: #{tpu_custom_call.1}
  #allocation0 [shape = 'u32[]', space=smem, size = 0x4, offset = 0x4, fixed_abs, tag = 'smem constant byte address 0x4 - core index']
  #allocation1 [shape = 'u32[72,128]{1,0:T(1,128)}', space=vmem, size = 0x9000, scoped, tag = 'internal scratch']
  %s0 = inlined_call_operand.vmem [shape: bf16[5,128], index: 0, kind: input, shape index: {}]
  %s1 = inlined_call_operand.vmem [shape: bf16[128,5], index: 1, kind: input, shape index: {}]
  %s2 = inlined_call_operand.vmem [shape: f32[128,1], index: 2, kind: input, shape index: {}]
  %s3 = inlined_call_operand.vmem [shape: bf16[64,128], index: 3, kind: input, shape index: {}]
  %s4 = inlined_call_operand.vmem [shape: f32[64,1], index: 4, kind: input, shape index: {}]
  %s5 = inlined_call_operand.vmem [shape: bf16[32,64], index: 5, kind: input, shape index: {}]
  %s6 = inlined_call_operand.vmem [shape: f32[32,1], index: 6, kind: input, shape index: {}]
  %s7 = inlined_call_operand.vmem [shape: bf16[4,32], index: 7, kind: input, shape index: {}]
  %s8 = inlined_call_operand.vmem [shape: f32[4,1], index: 8, kind: input, shape index: {}]
  %s9 = inlined_call_operand.hbm [shape: f32[4,128], index: 9, kind: output, shape index: {}]
  %s10 = sld [smem:[#allocation0]]
  $region46: #{tpu_custom_call.1} parent=0
    _
  %s12 = ssub.s32 1, %s10
  %s13 = scalar_select 0, %s12, %s10
  $region1: #{tpu_custom_call.1} parent=0
    #allocation2 [shape = 'u8[2048]{0}', space=vmem, size = 0x800, scoped, tag = 'output window, operand 0, single buffered']
    #allocation3 [shape = 's32[1]{0}', space=sflag, size = 0x4, scoped, tag = 'scoped memory for tpu_custom_call.1']
    %14 = vsyncpa [#allocation3], 0
    // Predicated region
    $region2: #{tpu_custom_call.1} parent=1 // pred_check
      _
    $region3: #{tpu_custom_call.1} parent=1 // pred_check_branch
      %16 = sbr.rel (0) target = $region5
    $region4: #{tpu_custom_call.1} parent=1 // pred_region
      _
    $region5: #{tpu_custom_call.1} parent=1 // pred_fallthru
      _
    // Predicated region
    $region6: #{tpu_custom_call.1} parent=1 // pred_check
      _
    $region7: #{tpu_custom_call.1} parent=1 // pred_check_branch
      %18 = sbr.rel (0) target = $region9
    $region8: #{tpu_custom_call.1} parent=1 // pred_region
      _
    $region9: #{tpu_custom_call.1} parent=1 // pred_fallthru
      _
    // Predicated region
    $region10: #{tpu_custom_call.1} parent=1 // pred_check
      _
    $region11: #{tpu_custom_call.1} parent=1 // pred_check_branch
      %20 = sbr.rel (0) target = $region13
    $region12: #{tpu_custom_call.1} parent=1 // pred_region
      _
    $region13: #{tpu_custom_call.1} parent=1 // pred_fallthru
      _
    // Predicated region
    $region14: #{tpu_custom_call.1} parent=1 // pred_check
      _
    $region15: #{tpu_custom_call.1} parent=1 // pred_check_branch
      %22 = sbr.rel (0) target = $region17
    $region16: #{tpu_custom_call.1} parent=1 // pred_region
      _
    $region17: #{tpu_custom_call.1} parent=1 // pred_fallthru
      _
    // Predicated region
    $region18: #{tpu_custom_call.1} parent=1 // pred_check
      _
    $region19: #{tpu_custom_call.1} parent=1 // pred_check_branch
      %24 = sbr.rel (0) target = $region21
    $region20: #{tpu_custom_call.1} parent=1 // pred_region
      _
    $region21: #{tpu_custom_call.1} parent=1 // pred_fallthru
      _
    // Predicated region
    $region22: #{tpu_custom_call.1} parent=1 // pred_check
      _
    $region23: #{tpu_custom_call.1} parent=1 // pred_check_branch
      %26 = sbr.rel (0) target = $region25
    $region24: #{tpu_custom_call.1} parent=1 // pred_region
      _
    $region25: #{tpu_custom_call.1} parent=1 // pred_fallthru
      _
    // Predicated region
    $region26: #{tpu_custom_call.1} parent=1 // pred_check
      _
    $region27: #{tpu_custom_call.1} parent=1 // pred_check_branch
      %28 = sbr.rel (0) target = $region29
    $region28: #{tpu_custom_call.1} parent=1 // pred_region
      _
    $region29: #{tpu_custom_call.1} parent=1 // pred_fallthru
      _
    // Predicated region
    $region30: #{tpu_custom_call.1} parent=1 // pred_check
      _
    $region31: #{tpu_custom_call.1} parent=1 // pred_check_branch
      %30 = sbr.rel (0) target = $region33
    $region32: #{tpu_custom_call.1} parent=1 // pred_region
      _
    $region33: #{tpu_custom_call.1} parent=1 // pred_fallthru
      _
    // Predicated region
    $region34: #{tpu_custom_call.1} parent=1 // pred_check
      _
    $region35: #{tpu_custom_call.1} parent=1 // pred_check_branch
      %32 = sbr.rel (0) target = $region37
    $region36: #{tpu_custom_call.1} parent=1 // pred_region
      _
    $region37: #{tpu_custom_call.1} parent=1 // pred_fallthru
      _
    %v34 = vld [vmem:[%s0] sm:$0x7]
    %v35 = vld [vmem:[%s1] sm:$0xf]
    %v36 = vld [vmem:[%s1 + $0x4] sm:$0xf]
    %v37 = vld [vmem:[%s1 + $0x8] sm:$0xf]
    %v38 = vld [vmem:[%s1 + $0xc] sm:$0xf]
    %v39 = vld [vmem:[%s1 + $0x10] sm:$0xf]
    %v40 = vld [vmem:[%s1 + $0x14] sm:$0xf]
    %v41 = vld [vmem:[%s1 + $0x18] sm:$0xf]
    %v42 = vld [vmem:[%s1 + $0x1c] sm:$0xf]
    %v43 = vld [vmem:[%s1 + $0x20] sm:$0xf]
    %v44 = vld [vmem:[%s1 + $0x24] sm:$0xf]
    %v45 = vld [vmem:[%s1 + $0x28] sm:$0xf]
    %v46 = vld [vmem:[%s1 + $0x2c] sm:$0xf]
    %v47 = vld [vmem:[%s1 + $0x30] sm:$0xf]
    %v48 = vld [vmem:[%s1 + $0x34] sm:$0xf]
    %v49 = vld [vmem:[%s1 + $0x38] sm:$0xf]
    %v50 = vld [vmem:[%s1 + $0x3c] sm:$0xf]
    %v51 = vld [vmem:[%s2] sm:$0xff]
    %v52 = vld [vmem:[%s2 + $0x8] sm:$0xff]
    %v53 = vld [vmem:[%s2 + $0x10] sm:$0xff]
    %v54 = vld [vmem:[%s2 + $0x18] sm:$0xff]
    %v55 = vld [vmem:[%s2 + $0x20] sm:$0xff]
    %v56 = vld [vmem:[%s2 + $0x28] sm:$0xff]
    %v57 = vld [vmem:[%s2 + $0x30] sm:$0xff]
    %v58 = vld [vmem:[%s2 + $0x38] sm:$0xff]
    %v59 = vld [vmem:[%s2 + $0x40] sm:$0xff]
    %v60 = vld [vmem:[%s2 + $0x48] sm:$0xff]
    %v61 = vld [vmem:[%s2 + $0x50] sm:$0xff]
    %v62 = vld [vmem:[%s2 + $0x58] sm:$0xff]
    %v63 = vld [vmem:[%s2 + $0x60] sm:$0xff]
    %v64 = vld [vmem:[%s2 + $0x68] sm:$0xff]
    %v65 = vld [vmem:[%s2 + $0x70] sm:$0xff]
    %v66 = vld [vmem:[%s2 + $0x78] sm:$0xff]
    %68 = vset.pattern.permute.xlu0 0
    %69 = vperm.xlu0 %68, %v51
    %v70 = vpop.permute.xlu0 %69
    %73 = vset.pattern.permute.xlu0 0
    %74 = vperm.xlu0 %73, %v52
    %v75 = vpop.permute.xlu0 %74
    %78 = vset.pattern.permute.xlu0 0
    %79 = vperm.xlu0 %78, %v53
    %v80 = vpop.permute.xlu0 %79
    %83 = vset.pattern.permute.xlu0 0
    %84 = vperm.xlu0 %83, %v54
    %v85 = vpop.permute.xlu0 %84
    %88 = vset.pattern.permute.xlu0 0
    %89 = vperm.xlu0 %88, %v55
    %v90 = vpop.permute.xlu0 %89
    %93 = vset.pattern.permute.xlu0 0
    %94 = vperm.xlu0 %93, %v56
    %v95 = vpop.permute.xlu0 %94
    %98 = vset.pattern.permute.xlu0 0
    %99 = vperm.xlu0 %98, %v57
    %v100 = vpop.permute.xlu0 %99
    %103 = vset.pattern.permute.xlu0 0
    %104 = vperm.xlu0 %103, %v58
    %v105 = vpop.permute.xlu0 %104
    %108 = vset.pattern.permute.xlu0 0
    %109 = vperm.xlu0 %108, %v59
    %v110 = vpop.permute.xlu0 %109
    %113 = vset.pattern.permute.xlu0 0
    %114 = vperm.xlu0 %113, %v60
    %v115 = vpop.permute.xlu0 %114
    %118 = vset.pattern.permute.xlu0 0
    %119 = vperm.xlu0 %118, %v61
    %v120 = vpop.permute.xlu0 %119
    %123 = vset.pattern.permute.xlu0 0
    %124 = vperm.xlu0 %123, %v62
    %v125 = vpop.permute.xlu0 %124
    %128 = vset.pattern.permute.xlu0 0
    %129 = vperm.xlu0 %128, %v63
    %v130 = vpop.permute.xlu0 %129
    %133 = vset.pattern.permute.xlu0 0
    %134 = vperm.xlu0 %133, %v64
    %v135 = vpop.permute.xlu0 %134
    %138 = vset.pattern.permute.xlu0 0
    %139 = vperm.xlu0 %138, %v65
    %v140 = vpop.permute.xlu0 %139
    %143 = vset.pattern.permute.xlu0 0
    %144 = vperm.xlu0 %143, %v66
    %v145 = vpop.permute.xlu0 %144
    %v163 = vunpack.c.l.b16 %v35
    %v164 = vunpack.c.l.b16 %v36
    %v165 = vunpack.c.l.b16 %v37
    %v166 = vunpack.c.l.b16 %v38
    %v167 = vunpack.c.l.b16 %v39
    %v168 = vunpack.c.l.b16 %v40
    %v169 = vunpack.c.l.b16 %v41
    %v170 = vunpack.c.l.b16 %v42
    %v171 = vunpack.c.l.b16 %v43
    %v172 = vunpack.c.l.b16 %v44
    %v173 = vunpack.c.l.b16 %v45
    %v174 = vunpack.c.l.b16 %v46
    %v175 = vunpack.c.l.b16 %v47
    %v176 = vunpack.c.l.b16 %v48
    %v177 = vunpack.c.l.b16 %v49
    %v178 = vunpack.c.l.b16 %v50
    %v179 = vpack.c.b16 %v164, %v163
    %v180 = vpack.c.b16 %v166, %v165
    %v181 = vpack.c.b16 %v168, %v167
    %v182 = vpack.c.b16 %v170, %v169
    %v183 = vpack.c.b16 %v172, %v171
    %v184 = vpack.c.b16 %v174, %v173
    %v185 = vpack.c.b16 %v176, %v175
    %v186 = vpack.c.b16 %v178, %v177
    %vm187 = vcmask 39936
    %v189 = vsel %vm187, %v179, 0
    %v192 = vsel %vm187, %v180, 0
    %v195 = vsel %vm187, %v181, 0
    %v198 = vsel %vm187, %v182, 0
    %v201 = vsel %vm187, %v183, 0
    %v204 = vsel %vm187, %v184, 0
    %v207 = vsel %vm187, %v185, 0
    %v210 = vsel %vm187, %v186, 0
    %vm212 = vcmask 1041408
    %vm213 = vcmask 1042432
    %v214 = vsel %vm212, 4294967295, 65535
    %v215 = vsel %vm213, %v214, 0
    %v217 = vand.u32 %v34, %v215
    %219 = vmatpush.bf16.msra.mxu0 0
    %220 = vmatpush.bf16.msra.mxu0 0
    %221 = vmatpush.bf16.msra.mxu0 0
    %222 = vmatpush.bf16.msra.mxu0 0
    %223 = vmatpush.bf16.msra.mxu0 0
    %224 = vmatpush.bf16.msra.mxu0 0
    %225 = vmatpush.bf16.msra.mxu0 0
    %226 = vmatpush.bf16.msra.mxu0 %v217
    %227 = vmatmul.bf16.gmra.mxu0 %v189
    %v228 = vpop.f32.mrf.mxu0
    %v229 = vadd.f32 %v70, %v228
    %v230 = vpop.f32.mrf.mxu0
    %v231 = vadd.f32 %v75, %v230
    %232 = vmatmul.bf16.gmra.mxu0 %v192
    %v233 = vpop.f32.mrf.mxu0
    %v234 = vadd.f32 %v80, %v233
    %v235 = vpop.f32.mrf.mxu0
    %v236 = vadd.f32 %v85, %v235
    %237 = vmatmul.bf16.gmra.mxu0 %v195
    %v238 = vpop.f32.mrf.mxu0
    %v239 = vadd.f32 %v90, %v238
    %v240 = vpop.f32.mrf.mxu0
    %v241 = vadd.f32 %v95, %v240
    %242 = vmatmul.bf16.gmra.mxu0 %v198
    %v243 = vpop.f32.mrf.mxu0
    %v244 = vadd.f32 %v100, %v243
    %v245 = vpop.f32.mrf.mxu0
    %v246 = vadd.f32 %v105, %v245
    %247 = vmatmul.bf16.gmra.mxu0 %v201
    %v248 = vpop.f32.mrf.mxu0
    %v249 = vadd.f32 %v110, %v248
    %v250 = vpop.f32.mrf.mxu0
    %v251 = vadd.f32 %v115, %v250
    %252 = vmatmul.bf16.gmra.mxu0 %v204
    %v253 = vpop.f32.mrf.mxu0
    %v254 = vadd.f32 %v120, %v253
    %v255 = vpop.f32.mrf.mxu0
    %v256 = vadd.f32 %v125, %v255
    %257 = vmatmul.bf16.gmra.mxu0 %v207
    %v258 = vpop.f32.mrf.mxu0
    %v259 = vadd.f32 %v130, %v258
    %v260 = vpop.f32.mrf.mxu0
    %v261 = vadd.f32 %v135, %v260
    %262 = vmatmul.bf16.gmra.mxu0 %v210
    %v263 = vpop.f32.mrf.mxu0
    %v264 = vadd.f32 %v140, %v263
    %v265 = vpop.f32.mrf.mxu0
    %v266 = vadd.f32 %v145, %v265
    %267 = vdwg.mxu0
    %v268 = vmax.f32 %v229, 0.0
    %v269 = vmax.f32 %v231, 0.0
    %v270 = vmax.f32 %v234, 0.0
    %v271 = vmax.f32 %v236, 0.0
    %v272 = vmax.f32 %v239, 0.0
    %v273 = vmax.f32 %v241, 0.0
    %v274 = vmax.f32 %v244, 0.0
    %v275 = vmax.f32 %v246, 0.0
    %v276 = vmax.f32 %v249, 0.0
    %v277 = vmax.f32 %v251, 0.0
    %v278 = vmax.f32 %v254, 0.0
    %v279 = vmax.f32 %v256, 0.0
    %v280 = vmax.f32 %v259, 0.0
    %v281 = vmax.f32 %v261, 0.0
    %v282 = vmax.f32 %v264, 0.0
    %v283 = vmax.f32 %v266, 0.0
    %v284 = vpack.c.bf16 %v269, %v268
    %v285 = vpack.c.bf16 %v271, %v270
    %v286 = vpack.c.bf16 %v273, %v272
    %v287 = vpack.c.bf16 %v275, %v274
    %v288 = vpack.c.bf16 %v277, %v276
    %v289 = vpack.c.bf16 %v279, %v278
    %v290 = vpack.c.bf16 %v281, %v280
    %v291 = vpack.c.bf16 %v283, %v282
    %v292 = vld [vmem:[%s3] sm:$0xf]
    %v293 = vld [vmem:[%s3 + $0x4] sm:$0xf]
    %v294 = vld [vmem:[%s3 + $0x8] sm:$0xf]
    %v295 = vld [vmem:[%s3 + $0xc] sm:$0xf]
    %v296 = vld [vmem:[%s3 + $0x10] sm:$0xf]
    %v297 = vld [vmem:[%s3 + $0x14] sm:$0xf]
    %v298 = vld [vmem:[%s3 + $0x18] sm:$0xf]
    %v299 = vld [vmem:[%s3 + $0x1c] sm:$0xf]
    %v300 = vld [vmem:[%s4] sm:$0xff]
    %v301 = vld [vmem:[%s4 + $0x8] sm:$0xff]
    %v302 = vld [vmem:[%s4 + $0x10] sm:$0xff]
    %v303 = vld [vmem:[%s4 + $0x18] sm:$0xff]
    %v304 = vld [vmem:[%s4 + $0x20] sm:$0xff]
    %v305 = vld [vmem:[%s4 + $0x28] sm:$0xff]
    %v306 = vld [vmem:[%s4 + $0x30] sm:$0xff]
    %v307 = vld [vmem:[%s4 + $0x38] sm:$0xff]
    %309 = vset.pattern.permute.xlu0 0
    %310 = vperm.xlu0 %309, %v300
    %v311 = vpop.permute.xlu0 %310
    %314 = vset.pattern.permute.xlu0 0
    %315 = vperm.xlu0 %314, %v301
    %v316 = vpop.permute.xlu0 %315
    %319 = vset.pattern.permute.xlu0 0
    %320 = vperm.xlu0 %319, %v302
    %v321 = vpop.permute.xlu0 %320
    %324 = vset.pattern.permute.xlu0 0
    %325 = vperm.xlu0 %324, %v303
    %v326 = vpop.permute.xlu0 %325
    %329 = vset.pattern.permute.xlu0 0
    %330 = vperm.xlu0 %329, %v304
    %v331 = vpop.permute.xlu0 %330
    %334 = vset.pattern.permute.xlu0 0
    %335 = vperm.xlu0 %334, %v305
    %v336 = vpop.permute.xlu0 %335
    %339 = vset.pattern.permute.xlu0 0
    %340 = vperm.xlu0 %339, %v306
    %v341 = vpop.permute.xlu0 %340
    %344 = vset.pattern.permute.xlu0 0
    %345 = vperm.xlu0 %344, %v307
    %v346 = vpop.permute.xlu0 %345
    %v356 = vunpack.c.l.b16 %v292
    %v357 = vunpack.c.l.b16 %v293
    %v358 = vunpack.c.l.b16 %v294
    %v359 = vunpack.c.l.b16 %v295
    %v360 = vunpack.c.l.b16 %v296
    %v361 = vunpack.c.l.b16 %v297
    %v362 = vunpack.c.l.b16 %v298
    %v363 = vunpack.c.l.b16 %v299
    %v364 = vpack.c.b16 %v357, %v356
    %v365 = vpack.c.b16 %v359, %v358
    %v366 = vpack.c.b16 %v361, %v360
    %v367 = vpack.c.b16 %v363, %v362
    %372 = vmatpush.bf16.msra.mxu0 %v291
    %373 = vmatpush.bf16.msra.mxu0 %v290
    %374 = vmatpush.bf16.msra.mxu0 %v289
    %375 = vmatpush.bf16.msra.mxu0 %v288
    %376 = vmatpush.bf16.msra.mxu0 %v287
    %377 = vmatpush.bf16.msra.mxu0 %v286
    %378 = vmatpush.bf16.msra.mxu0 %v285
    %379 = vmatpush.bf16.msra.mxu0 %v284
    %380 = vmatmul.bf16.gmra.mxu0 %v364
    %v381 = vpop.f32.mrf.mxu0
    %v382 = vadd.f32 %v311, %v381
    %v383 = vpop.f32.mrf.mxu0
    %v384 = vadd.f32 %v316, %v383
    %385 = vmatmul.bf16.gmra.mxu0 %v365
    %v386 = vpop.f32.mrf.mxu0
    %v387 = vadd.f32 %v321, %v386
    %v388 = vpop.f32.mrf.mxu0
    %v389 = vadd.f32 %v326, %v388
    %390 = vmatmul.bf16.gmra.mxu0 %v366
    %v391 = vpop.f32.mrf.mxu0
    %v392 = vadd.f32 %v331, %v391
    %v393 = vpop.f32.mrf.mxu0
    %v394 = vadd.f32 %v336, %v393
    %395 = vmatmul.bf16.gmra.mxu0 %v367
    %v396 = vpop.f32.mrf.mxu0
    %v397 = vadd.f32 %v341, %v396
    %v398 = vpop.f32.mrf.mxu0
    %v399 = vadd.f32 %v346, %v398
    %400 = vdwg.mxu0
    %v401 = vpack.c.bf16 %v384, %v382
    %v402 = vpack.c.bf16 %v389, %v387
    %v403 = vpack.c.bf16 %v394, %v392
    %v404 = vpack.c.bf16 %v399, %v397
    %v405 = vld [vmem:[%s5] sm:$0xf]
    %v406 = vld [vmem:[%s5 + $0x4] sm:$0xf]
    %v407 = vld [vmem:[%s5 + $0x8] sm:$0xf]
    %v408 = vld [vmem:[%s5 + $0xc] sm:$0xf]
    %v409 = vld [vmem:[%s6] sm:$0xff]
    %v410 = vld [vmem:[%s6 + $0x8] sm:$0xff]
    %v411 = vld [vmem:[%s6 + $0x10] sm:$0xff]
    %v412 = vld [vmem:[%s6 + $0x18] sm:$0xff]
    %414 = vset.pattern.permute.xlu0 0
    %415 = vperm.xlu0 %414, %v409
    %v416 = vpop.permute.xlu0 %415
    %419 = vset.pattern.permute.xlu0 0
    %420 = vperm.xlu0 %419, %v410
    %v421 = vpop.permute.xlu0 %420
    %424 = vset.pattern.permute.xlu0 0
    %425 = vperm.xlu0 %424, %v411
    %v426 = vpop.permute.xlu0 %425
    %429 = vset.pattern.permute.xlu0 0
    %430 = vperm.xlu0 %429, %v412
    %v431 = vpop.permute.xlu0 %430
    %v437 = vunpack.c.l.b16 %v405
    %v438 = vunpack.c.l.b16 %v406
    %v439 = vunpack.c.l.b16 %v407
    %v440 = vunpack.c.l.b16 %v408
    %v441 = vpack.c.b16 %v438, %v437
    %v442 = vpack.c.b16 %v440, %v439
    %vm443 = vcmask 523264
    %v445 = vsel %vm443, %v441, 0
    %v448 = vsel %vm443, %v442, 0
    %450 = vmatpush.bf16.msra.mxu0 0
    %451 = vmatpush.bf16.msra.mxu0 0
    %452 = vmatpush.bf16.msra.mxu0 0
    %453 = vmatpush.bf16.msra.mxu0 0
    %454 = vmatpush.bf16.msra.mxu0 %v404
    %455 = vmatpush.bf16.msra.mxu0 %v403
    %456 = vmatpush.bf16.msra.mxu0 %v402
    %457 = vmatpush.bf16.msra.mxu0 %v401
    %458 = vmatmul.bf16.gmra.mxu0 %v445
    %v459 = vpop.f32.mrf.mxu0
    %v460 = vadd.f32 %v416, %v459
    %v461 = vpop.f32.mrf.mxu0
    %v462 = vadd.f32 %v421, %v461
    %463 = vmatmul.bf16.gmra.mxu0 %v448
    %v464 = vpop.f32.mrf.mxu0
    %v465 = vadd.f32 %v426, %v464
    %v466 = vpop.f32.mrf.mxu0
    %v467 = vadd.f32 %v431, %v466
    %468 = vdwg.mxu0
    %v469 = vmax.f32 %v460, 0.0
    %v470 = vmax.f32 %v462, 0.0
    %v471 = vmax.f32 %v465, 0.0
    %v472 = vmax.f32 %v467, 0.0
    %v473 = vpack.c.bf16 %v470, %v469
    %v474 = vpack.c.bf16 %v472, %v471
    %v475 = vld [vmem:[%s7] sm:$0x3]
    %v476 = vld [vmem:[%s8] sm:$0xf]
    %478 = vset.pattern.permute.xlu0 0
    %479 = vperm.xlu0 %478, %v476
    %v480 = vpop.permute.xlu0 %479
    %vm482 = vcmask 261120
    %v484 = vsel %vm482, %v475, 0
    %486 = vmatpush.bf16.msra.mxu0 0
    %487 = vmatpush.bf16.msra.mxu0 0
    %488 = vmatpush.bf16.msra.mxu0 0
    %489 = vmatpush.bf16.msra.mxu0 0
    %490 = vmatpush.bf16.msra.mxu0 0
    %491 = vmatpush.bf16.msra.mxu0 0
    %492 = vmatpush.bf16.msra.mxu0 %v474
    %493 = vmatpush.bf16.msra.mxu0 %v473
    %494 = vmatmul.bf16.gmra.mxu0 %v484
    %v495 = vpop.f32.mrf.mxu0
    %v496 = vadd.f32 %v480, %v495
    %v497 = vpop.f32.mrf.mxu0
    %498 = vdwg.mxu0
    %499 = vst [vmem:[#allocation2] sm:$0xf] %v496
    // Predicated region
    $region38: #{tpu_custom_call.1} parent=1 // pred_check
      _
    $region39: #{tpu_custom_call.1} parent=1 // pred_check_branch
      %501 = sbr.rel (0) target = $region41
    $region40: #{tpu_custom_call.1} parent=1 // pred_region
      %503 = vsyncadd [#allocation3], 0
      %s505 = sshll.u32 [#allocation2], 4
      %s506 = int_to_ptr.vmem [resolvable:$true] %s505
      %s507 = sshll.u32 %s9, 4
      %s508 = int_to_ptr.hbm [resolvable:$true] %s507
      %510 = dma.vmem_to_hbm [thread:$0]  %s506, 64, %s508, [#allocation3]
    $region41: #{tpu_custom_call.1} parent=1 // pred_fallthru
      _
    // Predicated region
    $region42: #{tpu_custom_call.1} parent=1 // pred_check
      _
    $region43: #{tpu_custom_call.1} parent=1 // pred_check_branch
      %512 = sbr.rel (0) target = $region45
    $region44: #{tpu_custom_call.1} parent=1 // pred_region
      %514 = dma.done [#allocation3], 64
    $region45: #{tpu_custom_call.1} parent=1 // pred_fallthru
      _
    %515 = vsyncpa [#allocation3], 1

</llo_original>
